<compile_context>
chip_gen: v6e
topology: v6e:2x2x1
jax: 0.10.0
libtpu: 0.0.40
codegen_flags: <defaults>
</compile_context>

<pallas_src>
import functools

import jax
import jax.numpy as jnp
from jax.experimental import pallas as pl
from jax.experimental.pallas import tpu as pltpu

BN_EPS = 1e-5


def _proj_head_kernel(x_ref, w1_ref, b1_ref, w2_ref, b2_ref, o_ref, *,
                      apply_sigmoid):
    # ---- Linear1 (BN pre-folded): [bm, D_in]bf16 @ [D_in, H]bf16 -> f32 (MXU) ----
    h = jnp.dot(x_ref[...], w1_ref[...], preferred_element_type=jnp.float32)
    h = h + b1_ref[...]                       # bias broadcast over batch rows (f32)
    h = jnp.maximum(h, 0.0)                   # ReLU (VPU, f32)

    # ---- Linear2: [bm, H]bf16 @ [H, D_out]bf16 -> f32 (MXU) ----
    y = jnp.dot(h.astype(w2_ref.dtype), w2_ref[...],
                preferred_element_type=jnp.float32)
    y = y + b2_ref[...]

    # Dropout(p=0.1) is identity in eval mode.
    if apply_sigmoid:                         # static branch (output_dims == 2)
        y = jax.nn.sigmoid(y)                 # EUP

    o_ref[...] = y.astype(o_ref.dtype)


def _pick_block_m(n, d_in, hidden, d_out, vmem_budget_bytes=24 << 20):
    """Largest batch tile that fits a conservative VMEM budget (v7x-safe)."""
    # Per-row bytes: bf16 x (double-buffered), f32 out (double-buffered),
    # plus the f32 hidden activation held in VMEM during compute.
    per_row = 2 * (d_in * 2) + 2 * (d_out * 4) + hidden * 4
    bm = vmem_budget_bytes // max(per_row, 1)
    bm = max(8, min(int(bm), 4096))
    bm = (bm // 8) * 8                        # (8,128) sublane constraint
    if n <= bm:
        return n                              # full array dim is always legal
    return bm


def projection_head_forward(x, params, *, output_dims, block_m=None):
    """x: [N, input_dims] float32. Returns [N, output_dims] float32."""
    n, d_in = x.shape
    w1, b1, gamma, beta, mean, var, w2, b2 = params
    hidden = w1.shape[1]
    d_out = w2.shape[1]
    assert d_out == output_dims

    # --- Fold BatchNorm (eval) into Linear1; cast MXU operands to bf16 ---
    scale = gamma * jax.lax.rsqrt(var + BN_EPS)            # [1, hidden]
    w1_f = (w1 * scale).astype(jnp.bfloat16)               # column-wise scale
    b1_f = ((b1 - mean) * scale + beta).astype(jnp.float32)
    w2_b = w2.astype(jnp.bfloat16)
    b2_f = b2.astype(jnp.float32)
    x_b = x.astype(jnp.bfloat16)

    bm = _pick_block_m(n, d_in, hidden, d_out) if block_m is None \
        else min(block_m, n)
    grid = (pl.cdiv(n, bm),)

    # Rough VMEM estimate -> explicit scoped limit (double-buffered x/out tiles,
    # resident weights/biases, f32 hidden activation).
    vmem_est = (2 * bm * d_in * 2 + 2 * bm * d_out * 4
                + d_in * hidden * 2 + hidden * d_out * 2
                + hidden * 4 + d_out * 4
                + bm * hidden * 4)
    vmem_limit = int(min(max(2 * vmem_est, 32 << 20), 48 << 20))

    kernel = functools.partial(_proj_head_kernel,
                               apply_sigmoid=(output_dims == 2))

    return pl.pallas_call(
        kernel,
        out_shape=jax.ShapeDtypeStruct((n, d_out), jnp.float32),
        grid_spec=pltpu.PrefetchScalarGridSpec(
            num_scalar_prefetch=0,
            grid=grid,
            in_specs=[
                pl.BlockSpec((bm, d_in), lambda i: (i, 0)),       # x tile (bf16)
                pl.BlockSpec((d_in, hidden), lambda i: (0, 0)),   # W1' (bf16, resident)
                pl.BlockSpec((1, hidden), lambda i: (0, 0)),      # b1' (f32, resident)
                pl.BlockSpec((hidden, d_out), lambda i: (0, 0)),  # W2 (bf16, resident)
                pl.BlockSpec((1, d_out), lambda i: (0, 0)),       # b2 (f32, resident)
            ],
            out_specs=pl.BlockSpec((bm, d_out), lambda i: (i, 0)),
        ),
        compiler_params=pltpu.CompilerParams(
            dimension_semantics=("parallel",),
            vmem_limit_bytes=vmem_limit),
    )(x_b, w1_f, b1_f, w2_b, b2_f)


def init_params(key, input_dims, hidden_dims, output_dims):
    """Deterministic synthetic parameters (shapes match the PyTorch module)."""
    ks = jax.random.split(key, 8)
    # PyTorch Linear weight is [out, in]; we store the transpose [in, out].
    w1 = jax.random.normal(ks[0], (input_dims, hidden_dims), jnp.float32) * 0.05
    b1 = jax.random.normal(ks[1], (1, hidden_dims), jnp.float32) * 0.05
    gamma = 1.0 + 0.1 * jax.random.normal(ks[2], (1, hidden_dims), jnp.float32)
    beta = 0.1 * jax.random.normal(ks[3], (1, hidden_dims), jnp.float32)
    mean = 0.1 * jax.random.normal(ks[4], (1, hidden_dims), jnp.float32)
    var = jnp.abs(jax.random.normal(ks[5], (1, hidden_dims), jnp.float32)) + 0.5
    w2 = jax.random.normal(ks[6], (hidden_dims, output_dims), jnp.float32) * 0.05
    b2 = jax.random.normal(ks[7], (1, output_dims), jnp.float32) * 0.05
    return (w1, b1, gamma, beta, mean, var, w2, b2)


def reference_forward(x, params, *, output_dims):
    """Pure-JAX f32 reference with the un-folded BN-eval formula."""
    w1, b1, gamma, beta, mean, var, w2, b2 = params
    h = x @ w1 + b1
    h = (h - mean) * jax.lax.rsqrt(var + BN_EPS) * gamma + beta
    h = jnp.maximum(h, 0.0)
    y = h @ w2 + b2
    if output_dims == 2:
        y = jax.nn.sigmoid(y)
    return y


if __name__ == "__main__":
    input_dims, hidden_dims, output_dims = 32, 128, 2
    batch = 8

    key = jax.random.PRNGKey(0)
    kx, kp = jax.random.split(key)
    x = jax.random.normal(kx, (batch, input_dims), jnp.float32)
    params = init_params(kp, input_dims, hidden_dims, output_dims)

    out = projection_head_forward(x, params, output_dims=output_dims)
    out = jax.block_until_ready(out)

    ref = reference_forward(x, params, output_dims=output_dims)
    assert out.shape == (batch, output_dims)
    # Tolerance relaxed vs. f32 reference because MXU operands are bf16
    # (accumulation stays f32); BN folding also changes rounding order slightly.
    assert jnp.allclose(out, ref, atol=2e-2, rtol=2e-2), "mismatch vs reference"

    print("KERNEL_OK")
</pallas_src>

<mosaic_0001>
module attributes {stable_mosaic.version = 11 : i64} {
  func.func @_proj_head_kernel(%arg0: i32, %arg1: memref<8x32xbf16, #tpu.memory_space<vmem>>, %arg2: memref<32x128xbf16, #tpu.memory_space<vmem>>, %arg3: memref<1x128xf32, #tpu.memory_space<vmem>>, %arg4: memref<128x2xbf16, #tpu.memory_space<vmem>>, %arg5: memref<1x2xf32, #tpu.memory_space<vmem>>, %arg6: memref<8x2xf32, #tpu.memory_space<vmem>>) attributes {dimension_semantics = [#tpu.dimension_semantics<parallel>], iteration_bounds = array<i64: 1>, scalar_prefetch = 0 : i64, scratch_operands = 0 : i64, tpu.core_type = #tpu.core_type<tc>, window_params = [{transform_indices = @transform_0, window_bounds = array<i64: 8, 32>}, {pipeline_mode = #tpu.pipeline_mode<synchronous>, transform_indices = @transform_1, window_bounds = array<i64: 32, 128>}, {pipeline_mode = #tpu.pipeline_mode<synchronous>, transform_indices = @transform_2, window_bounds = array<i64: 1, 128>}, {pipeline_mode = #tpu.pipeline_mode<synchronous>, transform_indices = @transform_3, window_bounds = array<i64: 128, 2>}, {pipeline_mode = #tpu.pipeline_mode<synchronous>, transform_indices = @transform_4, window_bounds = array<i64: 1, 2>}, {transform_indices = @transform_5, window_bounds = array<i64: 8, 2>}]} {
    %c0 = arith.constant 0 : index
    %c0_0 = arith.constant 0 : index
    %0 = vector.load %arg1[%c0, %c0_0] : memref<8x32xbf16, #tpu.memory_space<vmem>>, vector<8x32xbf16>
    %c0_1 = arith.constant 0 : index
    %c0_2 = arith.constant 0 : index
    %1 = vector.load %arg2[%c0_1, %c0_2] : memref<32x128xbf16, #tpu.memory_space<vmem>>, vector<32x128xbf16>
    %cst = arith.constant dense<0.000000e+00> : vector<8x128xf32>
    %2 = tpu.matmul %0, %1, %cst {dimension_numbers = #tpu.dot_dimension_numbers<[1], [0], [0], [1], [0, 0, 1, 1], [], []>} : vector<8x32xbf16>, vector<32x128xbf16>, vector<8x128xf32> -> vector<8x128xf32>
    %c0_3 = arith.constant 0 : index
    %c0_4 = arith.constant 0 : index
    %3 = vector.load %arg3[%c0_3, %c0_4] : memref<1x128xf32, #tpu.memory_space<vmem>>, vector<1x128xf32>
    %4 = vector.broadcast %3 : vector<1x128xf32> to vector<8x128xf32>
    %5 = arith.addf %2, %4 : vector<8x128xf32>
    %cst_5 = arith.constant 0.000000e+00 : f32
    %6 = vector.broadcast %cst_5 : f32 to vector<8x128xf32>
    %7 = arith.maximumf %5, %6 : vector<8x128xf32>
    %8 = arith.truncf %7 : vector<8x128xf32> to vector<8x128xbf16>
    %c0_6 = arith.constant 0 : index
    %c0_7 = arith.constant 0 : index
    %9 = vector.load %arg4[%c0_6, %c0_7] : memref<128x2xbf16, #tpu.memory_space<vmem>>, vector<128x2xbf16>
    %cst_8 = arith.constant dense<0.000000e+00> : vector<8x2xf32>
    %10 = tpu.matmul %8, %9, %cst_8 {dimension_numbers = #tpu.dot_dimension_numbers<[1], [0], [0], [1], [0, 0, 1, 1], [], []>} : vector<8x128xbf16>, vector<128x2xbf16>, vector<8x2xf32> -> vector<8x2xf32>
    %c0_9 = arith.constant 0 : index
    %c0_10 = arith.constant 0 : index
    %11 = vector.load %arg5[%c0_9, %c0_10] : memref<1x2xf32, #tpu.memory_space<vmem>>, vector<1x2xf32>
    %12 = vector.broadcast %11 : vector<1x2xf32> to vector<8x2xf32>
    %13 = arith.addf %10, %12 : vector<8x2xf32>
    %14 = arith.negf %13 : vector<8x2xf32>
    %15 = math.exp %14 : vector<8x2xf32>
    %cst_11 = arith.constant 1.000000e+00 : f32
    %16 = vector.broadcast %cst_11 : f32 to vector<8x2xf32>
    %17 = arith.addf %16, %15 : vector<8x2xf32>
    %18 = arith.divf %16, %17 : vector<8x2xf32>
    %c0_12 = arith.constant 0 : index
    %c0_13 = arith.constant 0 : index
    %19 = vector.load %arg6[%c0_12, %c0_13] : memref<8x2xf32, #tpu.memory_space<vmem>>, vector<8x2xf32>
    tpu.vector_store %arg6[%c0_12, %c0_13], %18 {strides = array<i32>} : memref<8x2xf32, #tpu.memory_space<vmem>>, vector<8x2xf32>,
    return
  }
  func.func @transform_0(%arg0: i32) -> (i32, i32) {
    %c0_i32 = arith.constant 0 : i32
    %c0_i32_0 = arith.constant 0 : i32
    return %arg0, %c0_i32 : i32, i32
  }
  func.func @transform_1(%arg0: i32) -> (i32, i32) {
    %c0_i32 = arith.constant 0 : i32
    %c0_i32_0 = arith.constant 0 : i32
    %c0_i32_1 = arith.constant 0 : i32
    return %c0_i32, %c0_i32_0 : i32, i32
  }
  func.func @transform_2(%arg0: i32) -> (i32, i32) {
    %c0_i32 = arith.constant 0 : i32
    %c0_i32_0 = arith.constant 0 : i32
    %c0_i32_1 = arith.constant 0 : i32
    return %c0_i32, %c0_i32_0 : i32, i32
  }
  func.func @transform_3(%arg0: i32) -> (i32, i32) {
    %c0_i32 = arith.constant 0 : i32
    %c0_i32_0 = arith.constant 0 : i32
    %c0_i32_1 = arith.constant 0 : i32
    return %c0_i32, %c0_i32_0 : i32, i32
  }
  func.func @transform_4(%arg0: i32) -> (i32, i32) {
    %c0_i32 = arith.constant 0 : i32
    %c0_i32_0 = arith.constant 0 : i32
    %c0_i32_1 = arith.constant 0 : i32
    return %c0_i32, %c0_i32_0 : i32, i32
  }
  func.func @transform_5(%arg0: i32) -> (i32, i32) {
    %c0_i32 = arith.constant 0 : i32
    %c0_i32_0 = arith.constant 0 : i32
    return %arg0, %c0_i32 : i32, i32
  }
}

</mosaic_0001>

<llo_original>
// kernel: tpu_custom_call.1
$region0: #{tpu_custom_call.1}
  #allocation0 [shape = 'u32[]', space=smem, size = 0x4, offset = 0x4, fixed_abs, tag = 'smem constant byte address 0x4 - core index']
  #allocation1 [shape = 'u32[144,128]{1,0:T(1,128)}', space=vmem, size = 0x12000, scoped, tag = 'internal scratch']
  %s0 = inlined_call_operand.vmem [shape: bf16[8,32], index: 0, kind: input, shape index: {}]
  %s1 = inlined_call_operand.vmem [shape: bf16[32,128], index: 1, kind: input, shape index: {}]
  %s2 = inlined_call_operand.vmem [shape: f32[1,128], index: 2, kind: input, shape index: {}]
  %s3 = inlined_call_operand.vmem [shape: bf16[128,2], index: 3, kind: input, shape index: {}]
  %s4 = inlined_call_operand.vmem [shape: f32[1,2], index: 4, kind: input, shape index: {}]
  %s5 = inlined_call_operand.vmem [shape: f32[8,2], index: 5, kind: output, shape index: {}]
  %s6 = sld [smem:[#allocation0]]
  $region30: #{tpu_custom_call.1} parent=0
    _
  %s8 = ssub.s32 1, %s6
  %s9 = scalar_select 0, %s8, %s6
  // Predicated region
  $region2: #{tpu_custom_call.1} parent=0 // pred_check
    _
  $region3: #{tpu_custom_call.1} parent=0 // pred_check_branch
    %11 = sbr.rel (0) target = $region5
  $region4: #{tpu_custom_call.1} parent=0 // pred_region
    _
  $region5: #{tpu_custom_call.1} parent=0 // pred_fallthru
    _
  // Predicated region
  $region6: #{tpu_custom_call.1} parent=0 // pred_check
    _
  $region7: #{tpu_custom_call.1} parent=0 // pred_check_branch
    %13 = sbr.rel (0) target = $region9
  $region8: #{tpu_custom_call.1} parent=0 // pred_region
    _
  $region9: #{tpu_custom_call.1} parent=0 // pred_fallthru
    _
  // Predicated region
  $region10: #{tpu_custom_call.1} parent=0 // pred_check
    _
  $region11: #{tpu_custom_call.1} parent=0 // pred_check_branch
    %15 = sbr.rel (0) target = $region13
  $region12: #{tpu_custom_call.1} parent=0 // pred_region
    _
  $region13: #{tpu_custom_call.1} parent=0 // pred_fallthru
    _
  // Predicated region
  $region14: #{tpu_custom_call.1} parent=0 // pred_check
    _
  $region15: #{tpu_custom_call.1} parent=0 // pred_check_branch
    %17 = sbr.rel (0) target = $region17
  $region16: #{tpu_custom_call.1} parent=0 // pred_region
    _
  $region17: #{tpu_custom_call.1} parent=0 // pred_fallthru
    _
  // Predicated region
  $region18: #{tpu_custom_call.1} parent=0 // pred_check
    _
  $region19: #{tpu_custom_call.1} parent=0 // pred_check_branch
    %19 = sbr.rel (0) target = $region21
  $region20: #{tpu_custom_call.1} parent=0 // pred_region
    _
  $region21: #{tpu_custom_call.1} parent=0 // pred_fallthru
    _
  %v21 = vld [vmem:[%s0] sm:$0xf]
  %v22 = vld [vmem:[%s1] sm:$0xf]
  %v23 = vld [vmem:[%s1 + $0x4] sm:$0xf]
  %v24 = vld [vmem:[%s1 + $0x8] sm:$0xf]
  %v25 = vld [vmem:[%s1 + $0xc] sm:$0xf]
  %v26 = vld [vmem:[%s2] sm:$0x1]
  %v28 = vlaneseq
  %v29 = vshrl.u32 %v28, 7
  %v30 = vsub.s32 0, %v29
  %v31 = vrot.slane %v26, %v30
  %v37 = vunpack.c.l.b16 %v22
  %v38 = vunpack.c.l.b16 %v23
  %v39 = vunpack.c.l.b16 %v24
  %v40 = vunpack.c.l.b16 %v25
  %v41 = vpack.c.b16 %v38, %v37
  %v42 = vpack.c.b16 %v40, %v39
  %vm45 = vcmask 261120
  %v47 = vsel %vm45, %v21, 0
  %49 = vmatprep.subr.bf16.mxu0 0
  %50 = vmatpush1.bf16.msra.mxu0 0
  %51 = vmatprep.subr.bf16.mxu0 0
  %52 = vmatpush1.bf16.msra.mxu0 0
  %53 = vmatprep.subr.bf16.mxu0 0
  %54 = vmatpush1.bf16.msra.mxu0 0
  %55 = vmatprep.subr.bf16.mxu0 0
  %56 = vmatpush1.bf16.msra.mxu0 0
  %57 = vmatprep.subr.bf16.mxu0 0
  %58 = vmatpush1.bf16.msra.mxu0 0
  %59 = vmatprep.subr.bf16.mxu0 0
  %60 = vmatpush1.bf16.msra.mxu0 0
  %61 = vmatprep.subr.bf16.mxu0 0
  %62 = vmatpush1.bf16.msra.mxu0 %v42
  %63 = vmatprep.subr.bf16.mxu0 0
  %64 = vmatpush1.bf16.msra.mxu0 %v41
  %65 = vmatprep.subr.bf16.mxu0 0
  %66 = vmatpush2.bf16.msra.mxu0 0
  %67 = vmatprep.subr.bf16.mxu0 0
  %68 = vmatpush2.bf16.msra.mxu0 0
  %69 = vmatprep.subr.bf16.mxu0 0
  %70 = vmatpush2.bf16.msra.mxu0 0
  %71 = vmatprep.subr.bf16.mxu0 0
  %72 = vmatpush2.bf16.msra.mxu0 0
  %73 = vmatprep.subr.bf16.mxu0 0
  %74 = vmatpush2.bf16.msra.mxu0 0
  %75 = vmatprep.subr.bf16.mxu0 0
  %76 = vmatpush2.bf16.msra.mxu0 0
  %77 = vmatprep.subr.bf16.mxu0 0
  %78 = vmatpush2.bf16.msra.mxu0 0
  %79 = vmatprep.subr.bf16.mxu0 0
  %80 = vmatpush2.bf16.msra.mxu0 0
  %81 = vmatprep.mubr.bf16.mxu0 0
  %82 = vmatmul.mubr.bf16.gmra.mxu0 %v47
  %v83 = vpop.f32.mrf.mxu0
  %v84 = vadd.f32 %v31, %v83
  %v85 = vpop.f32.mrf.mxu0
  %v86 = vpop.f32.mrf.mxu0
  %v87 = vpop.f32.mrf.mxu0
  %88 = vdwg.mxu0
  %v89 = vmax.f32 %v84, 0.0
  %v90 = vpack.c.bf16 %v89, %v89
  %v91 = vld [vmem:[%s3] sm:$0xf]
  %v92 = vld [vmem:[%s3 + $0x4] sm:$0xf]
  %v93 = vld [vmem:[%s3 + $0x8] sm:$0xf]
  %v94 = vld [vmem:[%s3 + $0xc] sm:$0xf]
  %v95 = vld [vmem:[%s3 + $0x10] sm:$0xf]
  %v96 = vld [vmem:[%s3 + $0x14] sm:$0xf]
  %v97 = vld [vmem:[%s3 + $0x18] sm:$0xf]
  %v98 = vld [vmem:[%s3 + $0x1c] sm:$0xf]
  %v99 = vld [vmem:[%s3 + $0x20] sm:$0xf]
  %v100 = vld [vmem:[%s3 + $0x24] sm:$0xf]
  %v101 = vld [vmem:[%s3 + $0x28] sm:$0xf]
  %v102 = vld [vmem:[%s3 + $0x2c] sm:$0xf]
  %v103 = vld [vmem:[%s3 + $0x30] sm:$0xf]
  %v104 = vld [vmem:[%s3 + $0x34] sm:$0xf]
  %v105 = vld [vmem:[%s3 + $0x38] sm:$0xf]
  %v106 = vld [vmem:[%s3 + $0x3c] sm:$0xf]
  %v107 = vld [vmem:[%s4] sm:$0x1]
  %v109 = vlaneseq
  %v110 = vshrl.u32 %v109, 7
  %v111 = vsub.s32 0, %v110
  %v112 = vrot.slane %v107, %v111
  %v130 = vunpack.c.l.b16 %v91
  %v131 = vunpack.c.l.b16 %v92
  %v132 = vunpack.c.l.b16 %v93
  %v133 = vunpack.c.l.b16 %v94
  %v134 = vunpack.c.l.b16 %v95
  %v135 = vunpack.c.l.b16 %v96
  %v136 = vunpack.c.l.b16 %v97
  %v137 = vunpack.c.l.b16 %v98
  %v138 = vunpack.c.l.b16 %v99
  %v139 = vunpack.c.l.b16 %v100
  %v140 = vunpack.c.l.b16 %v101
  %v141 = vunpack.c.l.b16 %v102
  %v142 = vunpack.c.l.b16 %v103
  %v143 = vunpack.c.l.b16 %v104
  %v144 = vunpack.c.l.b16 %v105
  %v145 = vunpack.c.l.b16 %v106
  %v146 = vpack.c.b16 %v131, %v130
  %v147 = vpack.c.b16 %v133, %v132
  %v148 = vpack.c.b16 %v135, %v134
  %v149 = vpack.c.b16 %v137, %v136
  %v150 = vpack.c.b16 %v139, %v138
  %v151 = vpack.c.b16 %v141, %v140
  %v152 = vpack.c.b16 %v143, %v142
  %v153 = vpack.c.b16 %v145, %v144
  %162 = vmatprep.subr.bf16.mxu0 0
  %163 = vmatpush1.bf16.msra.mxu0 %v153
  %164 = vmatprep.subr.bf16.mxu0 0
  %165 = vmatpush1.bf16.msra.mxu0 %v152
  %166 = vmatprep.subr.bf16.mxu0 0
  %167 = vmatpush1.bf16.msra.mxu0 %v151
  %168 = vmatprep.subr.bf16.mxu0 0
  %169 = vmatpush1.bf16.msra.mxu0 %v150
  %170 = vmatprep.subr.bf16.mxu0 0
  %171 = vmatpush1.bf16.msra.mxu0 %v149
  %172 = vmatprep.subr.bf16.mxu0 0
  %173 = vmatpush1.bf16.msra.mxu0 %v148
  %174 = vmatprep.subr.bf16.mxu0 0
  %175 = vmatpush1.bf16.msra.mxu0 %v147
  %176 = vmatprep.subr.bf16.mxu0 0
  %177 = vmatpush1.bf16.msra.mxu0 %v146
  %178 = vmatprep.subr.bf16.mxu0 0
  %179 = vmatpush2.bf16.msra.mxu0 0
  %180 = vmatprep.subr.bf16.mxu0 0
  %181 = vmatpush2.bf16.msra.mxu0 0
  %182 = vmatprep.subr.bf16.mxu0 0
  %183 = vmatpush2.bf16.msra.mxu0 0
  %184 = vmatprep.subr.bf16.mxu0 0
  %185 = vmatpush2.bf16.msra.mxu0 0
  %186 = vmatprep.subr.bf16.mxu0 0
  %187 = vmatpush2.bf16.msra.mxu0 0
  %188 = vmatprep.subr.bf16.mxu0 0
  %189 = vmatpush2.bf16.msra.mxu0 0
  %190 = vmatprep.subr.bf16.mxu0 0
  %191 = vmatpush2.bf16.msra.mxu0 0
  %192 = vmatprep.subr.bf16.mxu0 0
  %193 = vmatpush2.bf16.msra.mxu0 0
  %194 = vmatprep.mubr.bf16.mxu0 0
  %195 = vmatmul.mubr.bf16.gmra.mxu0 %v90
  %v196 = vpop.f32.mrf.mxu0
  %v197 = vadd.f32 %v112, %v196
  %v198 = vpop.f32.mrf.mxu0
  %v199 = vpop.f32.mrf.mxu0
  %v200 = vpop.f32.mrf.mxu0
  %201 = vdwg.mxu0
  %v202 = vxor.u32 %v197, 2147483648
  %v203 = vmul.f32 %v202, 1.442695
  %v204 = vpow.pop %v203
  %v205 = vadd.f32 %v204, 1.0
  %v206 = vrcp.pop %v205
  %v207 = vmul.f32 1.0, %v206
  %vm208 = vcmask 15360
  %209 = vst.msk [vmem:[%s5] sm:$0xff] %vm208, %v207
  // Predicated region
  $region22: #{tpu_custom_call.1} parent=0 // pred_check
    _
  $region23: #{tpu_custom_call.1} parent=0 // pred_check_branch
    %211 = sbr.rel (0) target = $region25
  $region24: #{tpu_custom_call.1} parent=0 // pred_region
    _
  $region25: #{tpu_custom_call.1} parent=0 // pred_fallthru
    _
  // Predicated region
  $region26: #{tpu_custom_call.1} parent=0 // pred_check
    _
  $region27: #{tpu_custom_call.1} parent=0 // pred_check_branch
    %213 = sbr.rel (0) target = $region29
  $region28: #{tpu_custom_call.1} parent=0 // pred_region
    _
  $region29: #{tpu_custom_call.1} parent=0 // pred_fallthru
    _

</llo_original>
